<compile_context>
chip_gen: v7x
topology: tpu7x:2x2x1
jax: 0.10.0
libtpu: 0.0.40
codegen_flags: <defaults>
</compile_context>

<pallas_src>
import functools

import jax
import jax.numpy as jnp
from jax.experimental import pallas as pl
from jax.experimental.pallas import tpu as pltpu


def _leaky_relu(x, slope=0.1):
    return jnp.where(x > 0, x, slope * x)


def discriminator_kernel(zT_ref, w1_ref, b1_ref, w2_ref, b2_ref,
                         w3_ref, b3_ref, w4_ref, b4_ref, out_ref):
    # Transposed formulation: batch on lanes, features on sublanes.
    # Layer 1: (50, z_dim) @ (z_dim, TB) -> (50, TB)
    h = jnp.dot(w1_ref[...], zT_ref[...], preferred_element_type=jnp.float32)
    h = _leaky_relu(h + b1_ref[...])
    # Layer 2: (50, 50) @ (50, TB)
    h = jnp.dot(w2_ref[...], h, preferred_element_type=jnp.float32)
    h = _leaky_relu(h + b2_ref[...])
    # Layer 3: (50, 50) @ (50, TB)
    h = jnp.dot(w3_ref[...], h, preferred_element_type=jnp.float32)
    h = _leaky_relu(h + b3_ref[...])
    # Layer 4 (logits, no activation): (2, 50) @ (50, TB) -> (2, TB)
    out = jnp.dot(w4_ref[...], h, preferred_element_type=jnp.float32) + b4_ref[...]
    out_ref[...] = out.astype(out_ref.dtype)


def init_discriminator_params(key, z_dim, hidden=50, out_dim=2, std=0.02):
    """normal_init: weights ~ N(0, 0.02), biases = 0 (matches the PyTorch module).

    Weights are stored in PyTorch's (out_features, in_features) layout; biases
    are stored as (out_features, 1) columns for the transposed kernel layout.
    """
    ks = jax.random.split(key, 4)
    w1 = std * jax.random.normal(ks[0], (hidden, z_dim), jnp.float32)
    w2 = std * jax.random.normal(ks[1], (hidden, hidden), jnp.float32)
    w3 = std * jax.random.normal(ks[2], (hidden, hidden), jnp.float32)
    w4 = std * jax.random.normal(ks[3], (out_dim, hidden), jnp.float32)
    b1 = jnp.zeros((hidden, 1), jnp.float32)
    b2 = jnp.zeros((hidden, 1), jnp.float32)
    b3 = jnp.zeros((hidden, 1), jnp.float32)
    b4 = jnp.zeros((out_dim, 1), jnp.float32)
    return (w1, b1, w2, b2, w3, b3, w4, b4)


def _default_batch_tile(B):
    """Pick a batch tile that amortizes grid-step overhead and stays lane-aligned."""
    if B > 512:
        return 512                 # multiple of 128; >=2 grid steps (v7x megacore)
    if B >= 256 and B % 256 == 0:
        return B // 2              # still a multiple of 128, two parallel steps
    return B                       # small batch: one full-extent tile


@functools.partial(jax.jit, static_argnames=("batch_tile",))
def discriminator_forward(z, params, batch_tile=None):
    w1, b1, w2, b2, w3, b3, w4, b4 = params
    B, z_dim = z.shape
    hidden, out_dim = w1.shape[0], w4.shape[0]

    if batch_tile is None:
        batch_tile = _default_batch_tile(B)

    # Lane-dense layout: batch on the last (lane) axis everywhere.
    zT = z.T  # (z_dim, B)

    # Grid tiles the batch (lane) axis; every weight/bias is a full resident block.
    full = lambda a: pl.BlockSpec(a.shape, lambda i: (0,) * a.ndim)

    flops = 2 * B * (z_dim * hidden + 2 * hidden * hidden + hidden * out_dim)
    param_bytes = sum(int(p.size) * 4 for p in params)
    bytes_accessed = B * (z_dim + out_dim) * 4 + param_bytes
    cost = pl.CostEstimate(flops=flops, transcendentals=0,
                           bytes_accessed=bytes_accessed)

    outT = pl.pallas_call(
        discriminator_kernel,
        out_shape=jax.ShapeDtypeStruct((out_dim, B), jnp.float32),
        grid=(pl.cdiv(B, batch_tile),),
        in_specs=[
            pl.BlockSpec((z_dim, batch_tile), lambda i: (0, i)),
            full(w1), full(b1),
            full(w2), full(b2),
            full(w3), full(b3),
            full(w4), full(b4),
        ],
        out_specs=pl.BlockSpec((out_dim, batch_tile), lambda i: (0, i)),
        compiler_params=pltpu.CompilerParams(
            dimension_semantics=("parallel",)),
        cost_estimate=cost,
    )(zT, w1, b1, w2, b2, w3, b3, w4, b4)

    # Back to (B, out_dim); PyTorch forward ends with .squeeze().
    return jnp.squeeze(outT.T)


def discriminator_reference(z, params):
    """Pure-JAX reference (nn.Linear semantics: x @ W^T + b)."""
    w1, b1, w2, b2, w3, b3, w4, b4 = params
    h = _leaky_relu(z @ w1.T + b1.T)
    h = _leaky_relu(h @ w2.T + b2.T)
    h = _leaky_relu(h @ w3.T + b3.T)
    return jnp.squeeze(h @ w4.T + b4.T)


if __name__ == "__main__":
    key = jax.random.PRNGKey(0)
    k_param, k_z = jax.random.split(key)

    B, Z_DIM = 8, 32
    params = init_discriminator_params(k_param, Z_DIM)
    z = jax.random.normal(k_z, (B, Z_DIM), jnp.float32)

    out = discriminator_forward(z, params)
    out = jax.block_until_ready(out)

    ref = discriminator_reference(z, params)
    assert out.shape == ref.shape, (out.shape, ref.shape)
    assert jnp.allclose(out, ref, atol=1e-4, rtol=1e-4), "mismatch vs reference"

    print("KERNEL_OK")
</pallas_src>

<mosaic_0001>
module attributes {stable_mosaic.version = 11 : i64} {
  func.func @discriminator_kernel(%arg0: i32, %arg1: memref<32x8xf32, #tpu.memory_space<vmem>>, %arg2: memref<50x32xf32, #tpu.memory_space<vmem>>, %arg3: memref<50x1xf32, #tpu.memory_space<vmem>>, %arg4: memref<50x50xf32, #tpu.memory_space<vmem>>, %arg5: memref<50x1xf32, #tpu.memory_space<vmem>>, %arg6: memref<50x50xf32, #tpu.memory_space<vmem>>, %arg7: memref<50x1xf32, #tpu.memory_space<vmem>>, %arg8: memref<2x50xf32, #tpu.memory_space<vmem>>, %arg9: memref<2x1xf32, #tpu.memory_space<vmem>>, %arg10: memref<2x8xf32, #tpu.memory_space<vmem>>) attributes {dimension_semantics = [#tpu.dimension_semantics<parallel>], iteration_bounds = array<i64: 1>, scalar_prefetch = 0 : i64, scratch_operands = 0 : i64, tpu.core_type = #tpu.core_type<tc>, window_params = [{transform_indices = @transform_0, window_bounds = array<i64: 32, 8>}, {pipeline_mode = #tpu.pipeline_mode<synchronous>, transform_indices = @transform_1, window_bounds = array<i64: 50, 32>}, {pipeline_mode = #tpu.pipeline_mode<synchronous>, transform_indices = @transform_2, window_bounds = array<i64: 50, 1>}, {pipeline_mode = #tpu.pipeline_mode<synchronous>, transform_indices = @transform_3, window_bounds = array<i64: 50, 50>}, {pipeline_mode = #tpu.pipeline_mode<synchronous>, transform_indices = @transform_4, window_bounds = array<i64: 50, 1>}, {pipeline_mode = #tpu.pipeline_mode<synchronous>, transform_indices = @transform_5, window_bounds = array<i64: 50, 50>}, {pipeline_mode = #tpu.pipeline_mode<synchronous>, transform_indices = @transform_6, window_bounds = array<i64: 50, 1>}, {pipeline_mode = #tpu.pipeline_mode<synchronous>, transform_indices = @transform_7, window_bounds = array<i64: 2, 50>}, {pipeline_mode = #tpu.pipeline_mode<synchronous>, transform_indices = @transform_8, window_bounds = array<i64: 2, 1>}, {transform_indices = @transform_9, window_bounds = array<i64: 2, 8>}]} {
    %c0 = arith.constant 0 : index
    %c0_0 = arith.constant 0 : index
    %0 = vector.load %arg2[%c0, %c0_0] : memref<50x32xf32, #tpu.memory_space<vmem>>, vector<50x32xf32>
    %c0_1 = arith.constant 0 : index
    %c0_2 = arith.constant 0 : index
    %1 = vector.load %arg1[%c0_1, %c0_2] : memref<32x8xf32, #tpu.memory_space<vmem>>, vector<32x8xf32>
    %cst = arith.constant dense<0.000000e+00> : vector<50x8xf32>
    %2 = tpu.matmul %0, %1, %cst {dimension_numbers = #tpu.dot_dimension_numbers<[1], [0], [0], [1], [0, 0, 1, 1], [], []>} : vector<50x32xf32>, vector<32x8xf32>, vector<50x8xf32> -> vector<50x8xf32>
    %c0_3 = arith.constant 0 : index
    %c0_4 = arith.constant 0 : index
    %3 = vector.load %arg3[%c0_3, %c0_4] : memref<50x1xf32, #tpu.memory_space<vmem>>, vector<50x1xf32>
    %4 = vector.broadcast %3 : vector<50x1xf32> to vector<50x8xf32>
    %5 = arith.addf %2, %4 : vector<50x8xf32>
    %cst_5 = arith.constant 0.000000e+00 : f32
    %6 = vector.broadcast %cst_5 : f32 to vector<50x8xf32>
    %7 = arith.cmpf ogt, %5, %6 : vector<50x8xf32>
    %cst_6 = arith.constant 1.000000e-01 : f32
    %8 = vector.broadcast %cst_6 : f32 to vector<50x8xf32>
    %9 = arith.mulf %8, %5 : vector<50x8xf32>
    %10 = arith.select %7, %5, %9 : vector<50x8xi1>, vector<50x8xf32>
    %c0_7 = arith.constant 0 : index
    %c0_8 = arith.constant 0 : index
    %11 = vector.load %arg4[%c0_7, %c0_8] : memref<50x50xf32, #tpu.memory_space<vmem>>, vector<50x50xf32>
    %cst_9 = arith.constant dense<0.000000e+00> : vector<50x8xf32>
    %12 = tpu.matmul %11, %10, %cst_9 {dimension_numbers = #tpu.dot_dimension_numbers<[1], [0], [0], [1], [0, 0, 1, 1], [], []>} : vector<50x50xf32>, vector<50x8xf32>, vector<50x8xf32> -> vector<50x8xf32>
    %c0_10 = arith.constant 0 : index
    %c0_11 = arith.constant 0 : index
    %13 = vector.load %arg5[%c0_10, %c0_11] : memref<50x1xf32, #tpu.memory_space<vmem>>, vector<50x1xf32>
    %14 = vector.broadcast %13 : vector<50x1xf32> to vector<50x8xf32>
    %15 = arith.addf %12, %14 : vector<50x8xf32>
    %cst_12 = arith.constant 0.000000e+00 : f32
    %16 = vector.broadcast %cst_12 : f32 to vector<50x8xf32>
    %17 = arith.cmpf ogt, %15, %16 : vector<50x8xf32>
    %cst_13 = arith.constant 1.000000e-01 : f32
    %18 = vector.broadcast %cst_13 : f32 to vector<50x8xf32>
    %19 = arith.mulf %18, %15 : vector<50x8xf32>
    %20 = arith.select %17, %15, %19 : vector<50x8xi1>, vector<50x8xf32>
    %c0_14 = arith.constant 0 : index
    %c0_15 = arith.constant 0 : index
    %21 = vector.load %arg6[%c0_14, %c0_15] : memref<50x50xf32, #tpu.memory_space<vmem>>, vector<50x50xf32>
    %cst_16 = arith.constant dense<0.000000e+00> : vector<50x8xf32>
    %22 = tpu.matmul %21, %20, %cst_16 {dimension_numbers = #tpu.dot_dimension_numbers<[1], [0], [0], [1], [0, 0, 1, 1], [], []>} : vector<50x50xf32>, vector<50x8xf32>, vector<50x8xf32> -> vector<50x8xf32>
    %c0_17 = arith.constant 0 : index
    %c0_18 = arith.constant 0 : index
    %23 = vector.load %arg7[%c0_17, %c0_18] : memref<50x1xf32, #tpu.memory_space<vmem>>, vector<50x1xf32>
    %24 = vector.broadcast %23 : vector<50x1xf32> to vector<50x8xf32>
    %25 = arith.addf %22, %24 : vector<50x8xf32>
    %cst_19 = arith.constant 0.000000e+00 : f32
    %26 = vector.broadcast %cst_19 : f32 to vector<50x8xf32>
    %27 = arith.cmpf ogt, %25, %26 : vector<50x8xf32>
    %cst_20 = arith.constant 1.000000e-01 : f32
    %28 = vector.broadcast %cst_20 : f32 to vector<50x8xf32>
    %29 = arith.mulf %28, %25 : vector<50x8xf32>
    %30 = arith.select %27, %25, %29 : vector<50x8xi1>, vector<50x8xf32>
    %c0_21 = arith.constant 0 : index
    %c0_22 = arith.constant 0 : index
    %31 = vector.load %arg8[%c0_21, %c0_22] : memref<2x50xf32, #tpu.memory_space<vmem>>, vector<2x50xf32>
    %cst_23 = arith.constant dense<0.000000e+00> : vector<2x8xf32>
    %32 = tpu.matmul %31, %30, %cst_23 {dimension_numbers = #tpu.dot_dimension_numbers<[1], [0], [0], [1], [0, 0, 1, 1], [], []>} : vector<2x50xf32>, vector<50x8xf32>, vector<2x8xf32> -> vector<2x8xf32>
    %c0_24 = arith.constant 0 : index
    %c0_25 = arith.constant 0 : index
    %33 = vector.load %arg9[%c0_24, %c0_25] : memref<2x1xf32, #tpu.memory_space<vmem>>, vector<2x1xf32>
    %34 = vector.broadcast %33 : vector<2x1xf32> to vector<2x8xf32>
    %35 = arith.addf %32, %34 : vector<2x8xf32>
    %c0_26 = arith.constant 0 : index
    %c0_27 = arith.constant 0 : index
    %36 = vector.load %arg10[%c0_26, %c0_27] : memref<2x8xf32, #tpu.memory_space<vmem>>, vector<2x8xf32>
    tpu.vector_store %arg10[%c0_26, %c0_27], %35 {strides = array<i32>} : memref<2x8xf32, #tpu.memory_space<vmem>>, vector<2x8xf32>,
    return
  }
  func.func @transform_0(%arg0: i32) -> (i32, i32) {
    %c0_i32 = arith.constant 0 : i32
    %c0_i32_0 = arith.constant 0 : i32
    return %c0_i32, %arg0 : i32, i32
  }
  func.func @transform_1(%arg0: i32) -> (i32, i32) {
    %c0_i32 = arith.constant 0 : i32
    %c0_i32_0 = arith.constant 0 : i32
    %c0_i32_1 = arith.constant 0 : i32
    return %c0_i32, %c0_i32_0 : i32, i32
  }
  func.func @transform_2(%arg0: i32) -> (i32, i32) {
    %c0_i32 = arith.constant 0 : i32
    %c0_i32_0 = arith.constant 0 : i32
    %c0_i32_1 = arith.constant 0 : i32
    return %c0_i32, %c0_i32_0 : i32, i32
  }
  func.func @transform_3(%arg0: i32) -> (i32, i32) {
    %c0_i32 = arith.constant 0 : i32
    %c0_i32_0 = arith.constant 0 : i32
    %c0_i32_1 = arith.constant 0 : i32
    return %c0_i32, %c0_i32_0 : i32, i32
  }
  func.func @transform_4(%arg0: i32) -> (i32, i32) {
    %c0_i32 = arith.constant 0 : i32
    %c0_i32_0 = arith.constant 0 : i32
    %c0_i32_1 = arith.constant 0 : i32
    return %c0_i32, %c0_i32_0 : i32, i32
  }
  func.func @transform_5(%arg0: i32) -> (i32, i32) {
    %c0_i32 = arith.constant 0 : i32
    %c0_i32_0 = arith.constant 0 : i32
    %c0_i32_1 = arith.constant 0 : i32
    return %c0_i32, %c0_i32_0 : i32, i32
  }
  func.func @transform_6(%arg0: i32) -> (i32, i32) {
    %c0_i32 = arith.constant 0 : i32
    %c0_i32_0 = arith.constant 0 : i32
    %c0_i32_1 = arith.constant 0 : i32
    return %c0_i32, %c0_i32_0 : i32, i32
  }
  func.func @transform_7(%arg0: i32) -> (i32, i32) {
    %c0_i32 = arith.constant 0 : i32
    %c0_i32_0 = arith.constant 0 : i32
    %c0_i32_1 = arith.constant 0 : i32
    return %c0_i32, %c0_i32_0 : i32, i32
  }
  func.func @transform_8(%arg0: i32) -> (i32, i32) {
    %c0_i32 = arith.constant 0 : i32
    %c0_i32_0 = arith.constant 0 : i32
    %c0_i32_1 = arith.constant 0 : i32
    return %c0_i32, %c0_i32_0 : i32, i32
  }
  func.func @transform_9(%arg0: i32) -> (i32, i32) {
    %c0_i32 = arith.constant 0 : i32
    %c0_i32_0 = arith.constant 0 : i32
    return %c0_i32, %arg0 : i32, i32
  }
}

</mosaic_0001>

<llo_original>
// kernel: discriminator_forward.1
$region0: #{discriminator_forward.1}
  #allocation0 [shape = 'u32[]', space=smem, size = 0x4, offset = 0x4, fixed_abs, tag = 'smem constant byte address 0x4 - core index']
  #allocation1 [shape = 'u32[144,128]{1,0:T(1,128)}', space=vmem, size = 0x12000, scoped, tag = 'internal scratch']
  %s0 = inlined_call_operand.vmem [shape: f32[32,8], index: 0, kind: input, shape index: {}]
  %s1 = inlined_call_operand.vmem [shape: f32[50,32], index: 1, kind: input, shape index: {}]
  %s2 = inlined_call_operand.vmem [shape: f32[50,1], index: 2, kind: input, shape index: {}]
  %s3 = inlined_call_operand.vmem [shape: f32[50,50], index: 3, kind: input, shape index: {}]
  %s4 = inlined_call_operand.vmem [shape: f32[50,1], index: 4, kind: input, shape index: {}]
  %s5 = inlined_call_operand.vmem [shape: f32[50,50], index: 5, kind: input, shape index: {}]
  %s6 = inlined_call_operand.vmem [shape: f32[50,1], index: 6, kind: input, shape index: {}]
  %s7 = inlined_call_operand.vmem [shape: f32[2,50], index: 7, kind: input, shape index: {}]
  %s8 = inlined_call_operand.vmem [shape: f32[2,1], index: 8, kind: input, shape index: {}]
  %s9 = inlined_call_operand.hbm [shape: f32[2,8], index: 9, kind: output, shape index: {}]
  %s10 = sld [smem:[#allocation0]]
  $region46: #{discriminator_forward.1} parent=0
    _
  %s12 = ssub.s32 1, %s10
  %s13 = scalar_select 0, %s12, %s10
  $region1: #{discriminator_forward.1} parent=0
    #allocation2 [shape = 'u8[1024]{0}', space=vmem, size = 0x400, scoped, tag = 'output window, operand 0, single buffered']
    #allocation3 [shape = 's32[1]{0}', space=sflag, size = 0x4, scoped, tag = 'scoped memory for discriminator_forward.1']
    %14 = vsyncpa [#allocation3], 0
    // Predicated region
    $region2: #{discriminator_forward.1} parent=1 // pred_check
      _
    $region3: #{discriminator_forward.1} parent=1 // pred_check_branch
      %16 = sbr.rel (0) target = $region5
    $region4: #{discriminator_forward.1} parent=1 // pred_region
      _
    $region5: #{discriminator_forward.1} parent=1 // pred_fallthru
      _
    // Predicated region
    $region6: #{discriminator_forward.1} parent=1 // pred_check
      _
    $region7: #{discriminator_forward.1} parent=1 // pred_check_branch
      %18 = sbr.rel (0) target = $region9
    $region8: #{discriminator_forward.1} parent=1 // pred_region
      _
    $region9: #{discriminator_forward.1} parent=1 // pred_fallthru
      _
    // Predicated region
    $region10: #{discriminator_forward.1} parent=1 // pred_check
      _
    $region11: #{discriminator_forward.1} parent=1 // pred_check_branch
      %20 = sbr.rel (0) target = $region13
    $region12: #{discriminator_forward.1} parent=1 // pred_region
      _
    $region13: #{discriminator_forward.1} parent=1 // pred_fallthru
      _
    // Predicated region
    $region14: #{discriminator_forward.1} parent=1 // pred_check
      _
    $region15: #{discriminator_forward.1} parent=1 // pred_check_branch
      %22 = sbr.rel (0) target = $region17
    $region16: #{discriminator_forward.1} parent=1 // pred_region
      _
    $region17: #{discriminator_forward.1} parent=1 // pred_fallthru
      _
    // Predicated region
    $region18: #{discriminator_forward.1} parent=1 // pred_check
      _
    $region19: #{discriminator_forward.1} parent=1 // pred_check_branch
      %24 = sbr.rel (0) target = $region21
    $region20: #{discriminator_forward.1} parent=1 // pred_region
      _
    $region21: #{discriminator_forward.1} parent=1 // pred_fallthru
      _
    // Predicated region
    $region22: #{discriminator_forward.1} parent=1 // pred_check
      _
    $region23: #{discriminator_forward.1} parent=1 // pred_check_branch
      %26 = sbr.rel (0) target = $region25
    $region24: #{discriminator_forward.1} parent=1 // pred_region
      _
    $region25: #{discriminator_forward.1} parent=1 // pred_fallthru
      _
    // Predicated region
    $region26: #{discriminator_forward.1} parent=1 // pred_check
      _
    $region27: #{discriminator_forward.1} parent=1 // pred_check_branch
      %28 = sbr.rel (0) target = $region29
    $region28: #{discriminator_forward.1} parent=1 // pred_region
      _
    $region29: #{discriminator_forward.1} parent=1 // pred_fallthru
      _
    // Predicated region
    $region30: #{discriminator_forward.1} parent=1 // pred_check
      _
    $region31: #{discriminator_forward.1} parent=1 // pred_check_branch
      %30 = sbr.rel (0) target = $region33
    $region32: #{discriminator_forward.1} parent=1 // pred_region
      _
    $region33: #{discriminator_forward.1} parent=1 // pred_fallthru
      _
    // Predicated region
    $region34: #{discriminator_forward.1} parent=1 // pred_check
      _
    $region35: #{discriminator_forward.1} parent=1 // pred_check_branch
      %32 = sbr.rel (0) target = $region37
    $region36: #{discriminator_forward.1} parent=1 // pred_region
      _
    $region37: #{discriminator_forward.1} parent=1 // pred_fallthru
      _
    %v33 = vld [vmem:[%s1] sm:$0xff]
    %v34 = vld [vmem:[%s1 + $0x8] sm:$0xff]
    %v35 = vld [vmem:[%s1 + $0x10] sm:$0xff]
    %v36 = vld [vmem:[%s1 + $0x18] sm:$0xff]
    %v37 = vld [vmem:[%s1 + $0x20] sm:$0xff]
    %v38 = vld [vmem:[%s1 + $0x28] sm:$0xff]
    %v39 = vld [vmem:[%s1 + $0x30] sm:$0x3]
    %v40 = vld [vmem:[%s0] sm:$0xff]
    %v41 = vld [vmem:[%s0 + $0x8] sm:$0xff]
    %v42 = vld [vmem:[%s0 + $0x10] sm:$0xff]
    %v43 = vld [vmem:[%s0 + $0x18] sm:$0xff]
    %v44 = vld [vmem:[%s2] sm:$0xff]
    %v45 = vld [vmem:[%s2 + $0x8] sm:$0xff]
    %v46 = vld [vmem:[%s2 + $0x10] sm:$0xff]
    %v47 = vld [vmem:[%s2 + $0x18] sm:$0xff]
    %v48 = vld [vmem:[%s2 + $0x20] sm:$0xff]
    %v49 = vld [vmem:[%s2 + $0x28] sm:$0xff]
    %v50 = vld [vmem:[%s2 + $0x30] sm:$0x3]
    %52 = vset.pattern.permute.xlu0 0
    %53 = vperm.xlu0 %52, %v44
    %v54 = vpop.permute.xlu0 %53
    %57 = vset.pattern.permute.xlu0 0
    %58 = vperm.xlu0 %57, %v45
    %v59 = vpop.permute.xlu0 %58
    %62 = vset.pattern.permute.xlu0 0
    %63 = vperm.xlu0 %62, %v46
    %v64 = vpop.permute.xlu0 %63
    %67 = vset.pattern.permute.xlu0 0
    %68 = vperm.xlu0 %67, %v47
    %v69 = vpop.permute.xlu0 %68
    %72 = vset.pattern.permute.xlu0 0
    %73 = vperm.xlu0 %72, %v48
    %v74 = vpop.permute.xlu0 %73
    %77 = vset.pattern.permute.xlu0 0
    %78 = vperm.xlu0 %77, %v49
    %v79 = vpop.permute.xlu0 %78
    %82 = vset.pattern.permute.xlu0 0
    %83 = vperm.xlu0 %82, %v50
    %v84 = vpop.permute.xlu0 %83
    %vm86 = vcmask 261120
    %v88 = vsel %vm86, %v33, 0
    %v91 = vsel %vm86, %v34, 0
    %v94 = vsel %vm86, %v35, 0
    %v97 = vsel %vm86, %v36, 0
    %v100 = vsel %vm86, %v37, 0
    %v103 = vsel %vm86, %v38, 0
    %v106 = vsel %vm86, %v39, 0
    %108 = vmatprep.subr.mxu0 0.0
    %109 = vmatpush1.msra.mxu0 %v40
    %110 = vmatprep.subr.mxu0 0.0
    %111 = vmatpush1.msra.mxu0 %v41
    %112 = vmatprep.subr.mxu0 0.0
    %113 = vmatpush1.msra.mxu0 %v42
    %114 = vmatprep.subr.mxu0 0.0
    %115 = vmatpush1.msra.mxu0 %v43
    %116 = vmatprep.subr.mxu0 0.0
    %117 = vmatpush1.msra.mxu0 0.0
    %118 = vmatprep.subr.mxu0 0.0
    %119 = vmatpush1.msra.mxu0 0.0
    %120 = vmatprep.subr.mxu0 0.0
    %121 = vmatpush1.msra.mxu0 0.0
    %122 = vmatprep.subr.mxu0 0.0
    %123 = vmatpush1.msra.mxu0 0.0
    %124 = vmatprep.subr.mxu0 0.0
    %125 = vmatpush1.msra.mxu0 0.0
    %126 = vmatprep.subr.mxu0 0.0
    %127 = vmatpush1.msra.mxu0 0.0
    %128 = vmatprep.subr.mxu0 0.0
    %129 = vmatpush1.msra.mxu0 0.0
    %130 = vmatprep.subr.mxu0 0.0
    %131 = vmatpush1.msra.mxu0 0.0
    %132 = vmatprep.subr.mxu0 0.0
    %133 = vmatpush1.msra.mxu0 0.0
    %134 = vmatprep.subr.mxu0 0.0
    %135 = vmatpush1.msra.mxu0 0.0
    %136 = vmatprep.subr.mxu0 0.0
    %137 = vmatpush1.msra.mxu0 0.0
    %138 = vmatprep.subr.mxu0 0.0
    %139 = vmatpush1.msra.mxu0 0.0
    %140 = vmatprep.subr.mxu0 0.0
    %141 = vmatpush1.msra.mxu0 0.0
    %142 = vmatprep.subr.mxu0 0.0
    %143 = vmatpush1.msra.mxu0 0.0
    %144 = vmatprep.subr.mxu0 0.0
    %145 = vmatpush1.msra.mxu0 0.0
    %146 = vmatprep.subr.mxu0 0.0
    %147 = vmatpush1.msra.mxu0 0.0
    %148 = vmatprep.subr.mxu0 0.0
    %149 = vmatpush1.msra.mxu0 0.0
    %150 = vmatprep.subr.mxu0 0.0
    %151 = vmatpush1.msra.mxu0 0.0
    %152 = vmatprep.subr.mxu0 0.0
    %153 = vmatpush1.msra.mxu0 0.0
    %154 = vmatprep.subr.mxu0 0.0
    %155 = vmatpush1.msra.mxu0 0.0
    %156 = vmatprep.subr.mxu0 0.0
    %157 = vmatpush1.msra.mxu0 0.0
    %158 = vmatprep.subr.mxu0 0.0
    %159 = vmatpush1.msra.mxu0 0.0
    %160 = vmatprep.subr.mxu0 0.0
    %161 = vmatpush1.msra.mxu0 0.0
    %162 = vmatprep.subr.mxu0 0.0
    %163 = vmatpush1.msra.mxu0 0.0
    %164 = vmatprep.subr.mxu0 0.0
    %165 = vmatpush1.msra.mxu0 0.0
    %166 = vmatprep.subr.mxu0 0.0
    %167 = vmatpush1.msra.mxu0 0.0
    %168 = vmatprep.subr.mxu0 0.0
    %169 = vmatpush1.msra.mxu0 0.0
    %170 = vmatprep.subr.mxu0 0.0
    %171 = vmatpush1.msra.mxu0 0.0
    %172 = vmatprep.mubr.f32.mxu0 0.0
    %173 = vmatmul.mubr.f32.gmra.mrb[0].mxu0 %v88
    %v174 = vpop.f32.mrb[0].mxu0
    %v175 = vadd.f32 %v54, %v174
    %v176 = vpop.f32.mrb[0].mxu0
    %177 = vmatprep.mubr.f32.mxu0 0.0
    %178 = vmatmul.mubr.f32.gmra.mrb[0].mxu0 %v91
    %v179 = vpop.f32.mrb[0].mxu0
    %v180 = vadd.f32 %v59, %v179
    %v181 = vpop.f32.mrb[0].mxu0
    %182 = vmatprep.mubr.f32.mxu0 0.0
    %183 = vmatmul.mubr.f32.gmra.mrb[0].mxu0 %v94
    %v184 = vpop.f32.mrb[0].mxu0
    %v185 = vadd.f32 %v64, %v184
    %v186 = vpop.f32.mrb[0].mxu0
    %187 = vmatprep.mubr.f32.mxu0 0.0
    %188 = vmatmul.mubr.f32.gmra.mrb[0].mxu0 %v97
    %v189 = vpop.f32.mrb[0].mxu0
    %v190 = vadd.f32 %v69, %v189
    %v191 = vpop.f32.mrb[0].mxu0
    %192 = vmatprep.mubr.f32.mxu0 0.0
    %193 = vmatmul.mubr.f32.gmra.mrb[0].mxu0 %v100
    %v194 = vpop.f32.mrb[0].mxu0
    %v195 = vadd.f32 %v74, %v194
    %v196 = vpop.f32.mrb[0].mxu0
    %197 = vmatprep.mubr.f32.mxu0 0.0
    %198 = vmatmul.mubr.f32.gmra.mrb[0].mxu0 %v103
    %v199 = vpop.f32.mrb[0].mxu0
    %v200 = vadd.f32 %v79, %v199
    %v201 = vpop.f32.mrb[0].mxu0
    %202 = vmatprep.mubr.f32.mxu0 0.0
    %203 = vmatmul.mubr.f32.gmra.mrb[0].mxu0 %v106
    %v204 = vpop.f32.mrb[0].mxu0
    %v205 = vadd.f32 %v84, %v204
    %v206 = vpop.f32.mrb[0].mxu0
    %207 = vdwg.mxu0
    %vm208 = vcmp.gt.f32.partialorder %v175, 0.0
    %vm209 = vcmp.gt.f32.partialorder %v180, 0.0
    %vm210 = vcmp.gt.f32.partialorder %v185, 0.0
    %vm211 = vcmp.gt.f32.partialorder %v190, 0.0
    %vm212 = vcmp.gt.f32.partialorder %v195, 0.0
    %vm213 = vcmp.gt.f32.partialorder %v200, 0.0
    %vm214 = vcmp.gt.f32.partialorder %v205, 0.0
    %v215 = vmul.f32 %v175, 0.1
    %v216 = vmul.f32 %v180, 0.1
    %v217 = vmul.f32 %v185, 0.1
    %v218 = vmul.f32 %v190, 0.1
    %v219 = vmul.f32 %v195, 0.1
    %v220 = vmul.f32 %v200, 0.1
    %v221 = vmul.f32 %v205, 0.1
    %v222 = vsel %vm208, %v175, %v215
    %v223 = vsel %vm209, %v180, %v216
    %v224 = vsel %vm210, %v185, %v217
    %v225 = vsel %vm211, %v190, %v218
    %v226 = vsel %vm212, %v195, %v219
    %v227 = vsel %vm213, %v200, %v220
    %v228 = vsel %vm214, %v205, %v221
    %v229 = vld [vmem:[%s3] sm:$0xff]
    %v230 = vld [vmem:[%s3 + $0x8] sm:$0xff]
    %v231 = vld [vmem:[%s3 + $0x10] sm:$0xff]
    %v232 = vld [vmem:[%s3 + $0x18] sm:$0xff]
    %v233 = vld [vmem:[%s3 + $0x20] sm:$0xff]
    %v234 = vld [vmem:[%s3 + $0x28] sm:$0xff]
    %v235 = vld [vmem:[%s3 + $0x30] sm:$0x3]
    %v236 = vld [vmem:[%s4] sm:$0xff]
    %v237 = vld [vmem:[%s4 + $0x8] sm:$0xff]
    %v238 = vld [vmem:[%s4 + $0x10] sm:$0xff]
    %v239 = vld [vmem:[%s4 + $0x18] sm:$0xff]
    %v240 = vld [vmem:[%s4 + $0x20] sm:$0xff]
    %v241 = vld [vmem:[%s4 + $0x28] sm:$0xff]
    %v242 = vld [vmem:[%s4 + $0x30] sm:$0x3]
    %244 = vset.pattern.permute.xlu0 0
    %245 = vperm.xlu0 %244, %v236
    %v246 = vpop.permute.xlu0 %245
    %249 = vset.pattern.permute.xlu0 0
    %250 = vperm.xlu0 %249, %v237
    %v251 = vpop.permute.xlu0 %250
    %254 = vset.pattern.permute.xlu0 0
    %255 = vperm.xlu0 %254, %v238
    %v256 = vpop.permute.xlu0 %255
    %259 = vset.pattern.permute.xlu0 0
    %260 = vperm.xlu0 %259, %v239
    %v261 = vpop.permute.xlu0 %260
    %264 = vset.pattern.permute.xlu0 0
    %265 = vperm.xlu0 %264, %v240
    %v266 = vpop.permute.xlu0 %265
    %269 = vset.pattern.permute.xlu0 0
    %270 = vperm.xlu0 %269, %v241
    %v271 = vpop.permute.xlu0 %270
    %274 = vset.pattern.permute.xlu0 0
    %275 = vperm.xlu0 %274, %v242
    %v276 = vpop.permute.xlu0 %275
    %vm278 = vcmask 408576
    %v280 = vsel %vm278, %v229, 0
    %v283 = vsel %vm278, %v230, 0
    %v286 = vsel %vm278, %v231, 0
    %v289 = vsel %vm278, %v232, 0
    %v292 = vsel %vm278, %v233, 0
    %v295 = vsel %vm278, %v234, 0
    %v298 = vsel %vm278, %v235, 0
    %vm300 = vcmask 1041408
    %v302 = vsel %vm300, %v228, 0
    %304 = vmatprep.subr.mxu0 0.0
    %305 = vmatpush1.msra.mxu0 %v222
    %306 = vmatprep.subr.mxu0 0.0
    %307 = vmatpush1.msra.mxu0 %v223
    %308 = vmatprep.subr.mxu0 0.0
    %309 = vmatpush1.msra.mxu0 %v224
    %310 = vmatprep.subr.mxu0 0.0
    %311 = vmatpush1.msra.mxu0 %v225
    %312 = vmatprep.subr.mxu0 0.0
    %313 = vmatpush1.msra.mxu0 %v226
    %314 = vmatprep.subr.mxu0 0.0
    %315 = vmatpush1.msra.mxu0 %v227
    %316 = vmatprep.subr.mxu0 0.0
    %317 = vmatpush1.msra.mxu0 %v302
    %318 = vmatprep.subr.mxu0 0.0
    %319 = vmatpush1.msra.mxu0 0.0
    %320 = vmatprep.subr.mxu0 0.0
    %321 = vmatpush1.msra.mxu0 0.0
    %322 = vmatprep.subr.mxu0 0.0
    %323 = vmatpush1.msra.mxu0 0.0
    %324 = vmatprep.subr.mxu0 0.0
    %325 = vmatpush1.msra.mxu0 0.0
    %326 = vmatprep.subr.mxu0 0.0
    %327 = vmatpush1.msra.mxu0 0.0
    %328 = vmatprep.subr.mxu0 0.0
    %329 = vmatpush1.msra.mxu0 0.0
    %330 = vmatprep.subr.mxu0 0.0
    %331 = vmatpush1.msra.mxu0 0.0
    %332 = vmatprep.subr.mxu0 0.0
    %333 = vmatpush1.msra.mxu0 0.0
    %334 = vmatprep.subr.mxu0 0.0
    %335 = vmatpush1.msra.mxu0 0.0
    %336 = vmatprep.subr.mxu0 0.0
    %337 = vmatpush1.msra.mxu0 0.0
    %338 = vmatprep.subr.mxu0 0.0
    %339 = vmatpush1.msra.mxu0 0.0
    %340 = vmatprep.subr.mxu0 0.0
    %341 = vmatpush1.msra.mxu0 0.0
    %342 = vmatprep.subr.mxu0 0.0
    %343 = vmatpush1.msra.mxu0 0.0
    %344 = vmatprep.subr.mxu0 0.0
    %345 = vmatpush1.msra.mxu0 0.0
    %346 = vmatprep.subr.mxu0 0.0
    %347 = vmatpush1.msra.mxu0 0.0
    %348 = vmatprep.subr.mxu0 0.0
    %349 = vmatpush1.msra.mxu0 0.0
    %350 = vmatprep.subr.mxu0 0.0
    %351 = vmatpush1.msra.mxu0 0.0
    %352 = vmatprep.subr.mxu0 0.0
    %353 = vmatpush1.msra.mxu0 0.0
    %354 = vmatprep.subr.mxu0 0.0
    %355 = vmatpush1.msra.mxu0 0.0
    %356 = vmatprep.subr.mxu0 0.0
    %357 = vmatpush1.msra.mxu0 0.0
    %358 = vmatprep.subr.mxu0 0.0
    %359 = vmatpush1.msra.mxu0 0.0
    %360 = vmatprep.subr.mxu0 0.0
    %361 = vmatpush1.msra.mxu0 0.0
    %362 = vmatprep.subr.mxu0 0.0
    %363 = vmatpush1.msra.mxu0 0.0
    %364 = vmatprep.subr.mxu0 0.0
    %365 = vmatpush1.msra.mxu0 0.0
    %366 = vmatprep.subr.mxu0 0.0
    %367 = vmatpush1.msra.mxu0 0.0
    %368 = vmatprep.mubr.f32.mxu0 0.0
    %369 = vmatmul.mubr.f32.gmra.mrb[0].mxu0 %v280
    %v370 = vpop.f32.mrb[0].mxu0
    %v371 = vadd.f32 %v246, %v370
    %v372 = vpop.f32.mrb[0].mxu0
    %373 = vmatprep.mubr.f32.mxu0 0.0
    %374 = vmatmul.mubr.f32.gmra.mrb[0].mxu0 %v283
    %v375 = vpop.f32.mrb[0].mxu0
    %v376 = vadd.f32 %v251, %v375
    %v377 = vpop.f32.mrb[0].mxu0
    %378 = vmatprep.mubr.f32.mxu0 0.0
    %379 = vmatmul.mubr.f32.gmra.mrb[0].mxu0 %v286
    %v380 = vpop.f32.mrb[0].mxu0
    %v381 = vadd.f32 %v256, %v380
    %v382 = vpop.f32.mrb[0].mxu0
    %383 = vmatprep.mubr.f32.mxu0 0.0
    %384 = vmatmul.mubr.f32.gmra.mrb[0].mxu0 %v289
    %v385 = vpop.f32.mrb[0].mxu0
    %v386 = vadd.f32 %v261, %v385
    %v387 = vpop.f32.mrb[0].mxu0
    %388 = vmatprep.mubr.f32.mxu0 0.0
    %389 = vmatmul.mubr.f32.gmra.mrb[0].mxu0 %v292
    %v390 = vpop.f32.mrb[0].mxu0
    %v391 = vadd.f32 %v266, %v390
    %v392 = vpop.f32.mrb[0].mxu0
    %393 = vmatprep.mubr.f32.mxu0 0.0
    %394 = vmatmul.mubr.f32.gmra.mrb[0].mxu0 %v295
    %v395 = vpop.f32.mrb[0].mxu0
    %v396 = vadd.f32 %v271, %v395
    %v397 = vpop.f32.mrb[0].mxu0
    %398 = vmatprep.mubr.f32.mxu0 0.0
    %399 = vmatmul.mubr.f32.gmra.mrb[0].mxu0 %v298
    %v400 = vpop.f32.mrb[0].mxu0
    %v401 = vadd.f32 %v276, %v400
    %v402 = vpop.f32.mrb[0].mxu0
    %403 = vdwg.mxu0
    %vm404 = vcmp.gt.f32.partialorder %v371, 0.0
    %vm405 = vcmp.gt.f32.partialorder %v376, 0.0
    %vm406 = vcmp.gt.f32.partialorder %v381, 0.0
    %vm407 = vcmp.gt.f32.partialorder %v386, 0.0
    %vm408 = vcmp.gt.f32.partialorder %v391, 0.0
    %vm409 = vcmp.gt.f32.partialorder %v396, 0.0
    %vm410 = vcmp.gt.f32.partialorder %v401, 0.0
    %v411 = vmul.f32 %v371, 0.1
    %v412 = vmul.f32 %v376, 0.1
    %v413 = vmul.f32 %v381, 0.1
    %v414 = vmul.f32 %v386, 0.1
    %v415 = vmul.f32 %v391, 0.1
    %v416 = vmul.f32 %v396, 0.1
    %v417 = vmul.f32 %v401, 0.1
    %v418 = vsel %vm404, %v371, %v411
    %v419 = vsel %vm405, %v376, %v412
    %v420 = vsel %vm406, %v381, %v413
    %v421 = vsel %vm407, %v386, %v414
    %v422 = vsel %vm408, %v391, %v415
    %v423 = vsel %vm409, %v396, %v416
    %v424 = vsel %vm410, %v401, %v417
    %v425 = vld [vmem:[%s5] sm:$0xff]
    %v426 = vld [vmem:[%s5 + $0x8] sm:$0xff]
    %v427 = vld [vmem:[%s5 + $0x10] sm:$0xff]
    %v428 = vld [vmem:[%s5 + $0x18] sm:$0xff]
    %v429 = vld [vmem:[%s5 + $0x20] sm:$0xff]
    %v430 = vld [vmem:[%s5 + $0x28] sm:$0xff]
    %v431 = vld [vmem:[%s5 + $0x30] sm:$0x3]
    %v432 = vld [vmem:[%s6] sm:$0xff]
    %v433 = vld [vmem:[%s6 + $0x8] sm:$0xff]
    %v434 = vld [vmem:[%s6 + $0x10] sm:$0xff]
    %v435 = vld [vmem:[%s6 + $0x18] sm:$0xff]
    %v436 = vld [vmem:[%s6 + $0x20] sm:$0xff]
    %v437 = vld [vmem:[%s6 + $0x28] sm:$0xff]
    %v438 = vld [vmem:[%s6 + $0x30] sm:$0x3]
    %440 = vset.pattern.permute.xlu0 0
    %441 = vperm.xlu0 %440, %v432
    %v442 = vpop.permute.xlu0 %441
    %445 = vset.pattern.permute.xlu0 0
    %446 = vperm.xlu0 %445, %v433
    %v447 = vpop.permute.xlu0 %446
    %450 = vset.pattern.permute.xlu0 0
    %451 = vperm.xlu0 %450, %v434
    %v452 = vpop.permute.xlu0 %451
    %455 = vset.pattern.permute.xlu0 0
    %456 = vperm.xlu0 %455, %v435
    %v457 = vpop.permute.xlu0 %456
    %460 = vset.pattern.permute.xlu0 0
    %461 = vperm.xlu0 %460, %v436
    %v462 = vpop.permute.xlu0 %461
    %465 = vset.pattern.permute.xlu0 0
    %466 = vperm.xlu0 %465, %v437
    %v467 = vpop.permute.xlu0 %466
    %470 = vset.pattern.permute.xlu0 0
    %471 = vperm.xlu0 %470, %v438
    %v472 = vpop.permute.xlu0 %471
    %v475 = vsel %vm278, %v425, 0
    %v478 = vsel %vm278, %v426, 0
    %v481 = vsel %vm278, %v427, 0
    %v484 = vsel %vm278, %v428, 0
    %v487 = vsel %vm278, %v429, 0
    %v490 = vsel %vm278, %v430, 0
    %v493 = vsel %vm278, %v431, 0
    %v496 = vsel %vm300, %v424, 0
    %498 = vmatprep.subr.mxu0 0.0
    %499 = vmatpush1.msra.mxu0 %v418
    %500 = vmatprep.subr.mxu0 0.0
    %501 = vmatpush1.msra.mxu0 %v419
    %502 = vmatprep.subr.mxu0 0.0
    %503 = vmatpush1.msra.mxu0 %v420
    %504 = vmatprep.subr.mxu0 0.0
    %505 = vmatpush1.msra.mxu0 %v421
    %506 = vmatprep.subr.mxu0 0.0
    %507 = vmatpush1.msra.mxu0 %v422
    %508 = vmatprep.subr.mxu0 0.0
    %509 = vmatpush1.msra.mxu0 %v423
    %510 = vmatprep.subr.mxu0 0.0
    %511 = vmatpush1.msra.mxu0 %v496
    %512 = vmatprep.subr.mxu0 0.0
    %513 = vmatpush1.msra.mxu0 0.0
    %514 = vmatprep.subr.mxu0 0.0
    %515 = vmatpush1.msra.mxu0 0.0
    %516 = vmatprep.subr.mxu0 0.0
    %517 = vmatpush1.msra.mxu0 0.0
    %518 = vmatprep.subr.mxu0 0.0
    %519 = vmatpush1.msra.mxu0 0.0
    %520 = vmatprep.subr.mxu0 0.0
    %521 = vmatpush1.msra.mxu0 0.0
    %522 = vmatprep.subr.mxu0 0.0
    %523 = vmatpush1.msra.mxu0 0.0
    %524 = vmatprep.subr.mxu0 0.0
    %525 = vmatpush1.msra.mxu0 0.0
    %526 = vmatprep.subr.mxu0 0.0
    %527 = vmatpush1.msra.mxu0 0.0
    %528 = vmatprep.subr.mxu0 0.0
    %529 = vmatpush1.msra.mxu0 0.0
    %530 = vmatprep.subr.mxu0 0.0
    %531 = vmatpush1.msra.mxu0 0.0
    %532 = vmatprep.subr.mxu0 0.0
    %533 = vmatpush1.msra.mxu0 0.0
    %534 = vmatprep.subr.mxu0 0.0
    %535 = vmatpush1.msra.mxu0 0.0
    %536 = vmatprep.subr.mxu0 0.0
    %537 = vmatpush1.msra.mxu0 0.0
    %538 = vmatprep.subr.mxu0 0.0
    %539 = vmatpush1.msra.mxu0 0.0
    %540 = vmatprep.subr.mxu0 0.0
    %541 = vmatpush1.msra.mxu0 0.0
    %542 = vmatprep.subr.mxu0 0.0
    %543 = vmatpush1.msra.mxu0 0.0
    %544 = vmatprep.subr.mxu0 0.0
    %545 = vmatpush1.msra.mxu0 0.0
    %546 = vmatprep.subr.mxu0 0.0
    %547 = vmatpush1.msra.mxu0 0.0
    %548 = vmatprep.subr.mxu0 0.0
    %549 = vmatpush1.msra.mxu0 0.0
    %550 = vmatprep.subr.mxu0 0.0
    %551 = vmatpush1.msra.mxu0 0.0
    %552 = vmatprep.subr.mxu0 0.0
    %553 = vmatpush1.msra.mxu0 0.0
    %554 = vmatprep.subr.mxu0 0.0
    %555 = vmatpush1.msra.mxu0 0.0
    %556 = vmatprep.subr.mxu0 0.0
    %557 = vmatpush1.msra.mxu0 0.0
    %558 = vmatprep.subr.mxu0 0.0
    %559 = vmatpush1.msra.mxu0 0.0
    %560 = vmatprep.subr.mxu0 0.0
    %561 = vmatpush1.msra.mxu0 0.0
    %562 = vmatprep.mubr.f32.mxu0 0.0
    %563 = vmatmul.mubr.f32.gmra.mrb[0].mxu0 %v475
    %v564 = vpop.f32.mrb[0].mxu0
    %v565 = vadd.f32 %v442, %v564
    %v566 = vpop.f32.mrb[0].mxu0
    %567 = vmatprep.mubr.f32.mxu0 0.0
    %568 = vmatmul.mubr.f32.gmra.mrb[0].mxu0 %v478
    %v569 = vpop.f32.mrb[0].mxu0
    %v570 = vadd.f32 %v447, %v569
    %v571 = vpop.f32.mrb[0].mxu0
    %572 = vmatprep.mubr.f32.mxu0 0.0
    %573 = vmatmul.mubr.f32.gmra.mrb[0].mxu0 %v481
    %v574 = vpop.f32.mrb[0].mxu0
    %v575 = vadd.f32 %v452, %v574
    %v576 = vpop.f32.mrb[0].mxu0
    %577 = vmatprep.mubr.f32.mxu0 0.0
    %578 = vmatmul.mubr.f32.gmra.mrb[0].mxu0 %v484
    %v579 = vpop.f32.mrb[0].mxu0
    %v580 = vadd.f32 %v457, %v579
    %v581 = vpop.f32.mrb[0].mxu0
    %582 = vmatprep.mubr.f32.mxu0 0.0
    %583 = vmatmul.mubr.f32.gmra.mrb[0].mxu0 %v487
    %v584 = vpop.f32.mrb[0].mxu0
    %v585 = vadd.f32 %v462, %v584
    %v586 = vpop.f32.mrb[0].mxu0
    %587 = vmatprep.mubr.f32.mxu0 0.0
    %588 = vmatmul.mubr.f32.gmra.mrb[0].mxu0 %v490
    %v589 = vpop.f32.mrb[0].mxu0
    %v590 = vadd.f32 %v467, %v589
    %v591 = vpop.f32.mrb[0].mxu0
    %592 = vmatprep.mubr.f32.mxu0 0.0
    %593 = vmatmul.mubr.f32.gmra.mrb[0].mxu0 %v493
    %v594 = vpop.f32.mrb[0].mxu0
    %v595 = vadd.f32 %v472, %v594
    %v596 = vpop.f32.mrb[0].mxu0
    %597 = vdwg.mxu0
    %vm598 = vcmp.gt.f32.partialorder %v565, 0.0
    %vm599 = vcmp.gt.f32.partialorder %v570, 0.0
    %vm600 = vcmp.gt.f32.partialorder %v575, 0.0
    %vm601 = vcmp.gt.f32.partialorder %v580, 0.0
    %vm602 = vcmp.gt.f32.partialorder %v585, 0.0
    %vm603 = vcmp.gt.f32.partialorder %v590, 0.0
    %vm604 = vcmp.gt.f32.partialorder %v595, 0.0
    %v605 = vmul.f32 %v565, 0.1
    %v606 = vmul.f32 %v570, 0.1
    %v607 = vmul.f32 %v575, 0.1
    %v608 = vmul.f32 %v580, 0.1
    %v609 = vmul.f32 %v585, 0.1
    %v610 = vmul.f32 %v590, 0.1
    %v611 = vmul.f32 %v595, 0.1
    %v612 = vsel %vm598, %v565, %v605
    %v613 = vsel %vm599, %v570, %v606
    %v614 = vsel %vm600, %v575, %v607
    %v615 = vsel %vm601, %v580, %v608
    %v616 = vsel %vm602, %v585, %v609
    %v617 = vsel %vm603, %v590, %v610
    %v618 = vsel %vm604, %v595, %v611
    %v619 = vld [vmem:[%s7] sm:$0x3]
    %v620 = vld [vmem:[%s8] sm:$0x3]
    %622 = vset.pattern.permute.xlu0 0
    %623 = vperm.xlu0 %622, %v620
    %v624 = vpop.permute.xlu0 %623
    %v627 = vsel %vm278, %v619, 0
    %v630 = vsel %vm300, %v618, 0
    %632 = vmatprep.subr.mxu0 0.0
    %633 = vmatpush1.msra.mxu0 %v612
    %634 = vmatprep.subr.mxu0 0.0
    %635 = vmatpush1.msra.mxu0 %v613
    %636 = vmatprep.subr.mxu0 0.0
    %637 = vmatpush1.msra.mxu0 %v614
    %638 = vmatprep.subr.mxu0 0.0
    %639 = vmatpush1.msra.mxu0 %v615
    %640 = vmatprep.subr.mxu0 0.0
    %641 = vmatpush1.msra.mxu0 %v616
    %642 = vmatprep.subr.mxu0 0.0
    %643 = vmatpush1.msra.mxu0 %v617
    %644 = vmatprep.subr.mxu0 0.0
    %645 = vmatpush1.msra.mxu0 %v630
    %646 = vmatprep.subr.mxu0 0.0
    %647 = vmatpush1.msra.mxu0 0.0
    %648 = vmatprep.subr.mxu0 0.0
    %649 = vmatpush1.msra.mxu0 0.0
    %650 = vmatprep.subr.mxu0 0.0
    %651 = vmatpush1.msra.mxu0 0.0
    %652 = vmatprep.subr.mxu0 0.0
    %653 = vmatpush1.msra.mxu0 0.0
    %654 = vmatprep.subr.mxu0 0.0
    %655 = vmatpush1.msra.mxu0 0.0
    %656 = vmatprep.subr.mxu0 0.0
    %657 = vmatpush1.msra.mxu0 0.0
    %658 = vmatprep.subr.mxu0 0.0
    %659 = vmatpush1.msra.mxu0 0.0
    %660 = vmatprep.subr.mxu0 0.0
    %661 = vmatpush1.msra.mxu0 0.0
    %662 = vmatprep.subr.mxu0 0.0
    %663 = vmatpush1.msra.mxu0 0.0
    %664 = vmatprep.subr.mxu0 0.0
    %665 = vmatpush1.msra.mxu0 0.0
    %666 = vmatprep.subr.mxu0 0.0
    %667 = vmatpush1.msra.mxu0 0.0
    %668 = vmatprep.subr.mxu0 0.0
    %669 = vmatpush1.msra.mxu0 0.0
    %670 = vmatprep.subr.mxu0 0.0
    %671 = vmatpush1.msra.mxu0 0.0
    %672 = vmatprep.subr.mxu0 0.0
    %673 = vmatpush1.msra.mxu0 0.0
    %674 = vmatprep.subr.mxu0 0.0
    %675 = vmatpush1.msra.mxu0 0.0
    %676 = vmatprep.subr.mxu0 0.0
    %677 = vmatpush1.msra.mxu0 0.0
    %678 = vmatprep.subr.mxu0 0.0
    %679 = vmatpush1.msra.mxu0 0.0
    %680 = vmatprep.subr.mxu0 0.0
    %681 = vmatpush1.msra.mxu0 0.0
    %682 = vmatprep.subr.mxu0 0.0
    %683 = vmatpush1.msra.mxu0 0.0
    %684 = vmatprep.subr.mxu0 0.0
    %685 = vmatpush1.msra.mxu0 0.0
    %686 = vmatprep.subr.mxu0 0.0
    %687 = vmatpush1.msra.mxu0 0.0
    %688 = vmatprep.subr.mxu0 0.0
    %689 = vmatpush1.msra.mxu0 0.0
    %690 = vmatprep.subr.mxu0 0.0
    %691 = vmatpush1.msra.mxu0 0.0
    %692 = vmatprep.subr.mxu0 0.0
    %693 = vmatpush1.msra.mxu0 0.0
    %694 = vmatprep.subr.mxu0 0.0
    %695 = vmatpush1.msra.mxu0 0.0
    %696 = vmatprep.mubr.f32.mxu0 0.0
    %697 = vmatmul.mubr.f32.gmra.mrb[0].mxu0 %v627
    %v698 = vpop.f32.mrb[0].mxu0
    %v699 = vadd.f32 %v624, %v698
    %v700 = vpop.f32.mrb[0].mxu0
    %701 = vdwg.mxu0
    %vm702 = vcmask 58368
    %703 = vst.msk [vmem:[#allocation2] sm:$0x3] %vm702, %v699
    // Predicated region
    $region38: #{discriminator_forward.1} parent=1 // pred_check
      _
    $region39: #{discriminator_forward.1} parent=1 // pred_check_branch
      %705 = sbr.rel (0) target = $region41
    $region40: #{discriminator_forward.1} parent=1 // pred_region
      %s707 = ssub.s32 32, 32
      %708 = vsyncadd [#allocation3], %s707
      %s710 = sshll.u32 [#allocation2], 4
      %s711 = int_to_ptr.vmem [resolvable:$true] %s710
      %713 = dma.vmem_to_hbm [thread:$0]  %s711, 32, %s9, [#allocation3]
    $region41: #{discriminator_forward.1} parent=1 // pred_fallthru
      _
    // Predicated region
    $region42: #{discriminator_forward.1} parent=1 // pred_check
      _
    $region43: #{discriminator_forward.1} parent=1 // pred_check_branch
      %715 = sbr.rel (0) target = $region45
    $region44: #{discriminator_forward.1} parent=1 // pred_region
      %716 = dma.done [#allocation3], 32
    $region45: #{discriminator_forward.1} parent=1 // pred_fallthru
      _
    %717 = vsyncpa [#allocation3], 1

</llo_original>
